<compile_context>
chip_gen: v5e
topology: v5e:2x2
jax: 0.10.0
libtpu: 0.0.40
codegen_flags: <defaults>
</compile_context>

<pallas_src>
import jax
import jax.numpy as jnp
from jax import lax
from jax.experimental import pallas as pl
from jax.experimental.pallas import tpu as pltpu

FOCAL_ALPHA = 0.25          # gamma=2 baked in as an explicit q*q (no pow)
J2DS_NORM_SCALE = 518.0
MAX_INST = 8                # matched-instance bucket (raise if more matches)

_LANES = 128
_SUBLANES = 8
_TILE = _LANES * _SUBLANES

_VMEM = pl.BlockSpec(memory_space=pltpu.MemorySpace.VMEM)
_SMEM = pl.BlockSpec(memory_space=pltpu.MemorySpace.SMEM)

BETAS_WEIGHT = jnp.array(
    [2.56, 1.28, 0.64, 0.64, 0.32, 0.32, 0.32, 0.32, 0.32, 0.32],
    dtype=jnp.float32)


# --------------------------- slab helpers -----------------------------------

def _rows(n_elems):
    """Rows of 128 lanes needed for n_elems, rounded to a multiple of 8."""
    return max(_SUBLANES, -(-n_elems // _TILE) * _SUBLANES)


def _seg(x, rows, pad_val):
    """Flatten -> pad to rows*128 with a loss-neutral value -> (rows, 128)."""
    flat = jnp.ravel(x).astype(jnp.float32)
    need = rows * _LANES - flat.shape[0]
    assert need >= 0, "segment bucket too small; raise MAX_INST"
    flat = jnp.pad(flat, (0, need), constant_values=pad_val)
    return flat.reshape(rows, _LANES)


# ----------------------------- fused kernel ---------------------------------

def _build_kernel(r_conf, r_pose, r_beta, r_j3d, r_j2d, r_dep):
    """Row counts are functions of (B, Q, MAX_INST) only — static per bucket."""
    o_pose = r_conf
    o_dep = o_pose + r_pose + r_beta + r_j3d + r_j2d

    def kernel(scales_ref, nbox_ref, s_ref, t_ref, box_ref, out_ref):
        sv = s_ref[...]
        tv = t_ref[...]

        # ---- confs: focal loss on probabilities (torch uses F.binary_cross_
        # entropy, i.e. sigmoid already applied). Binary targets => BCE ==
        # -log(p_t); (1-p_t)^2 as an explicit square.
        p = sv[0:r_conf]
        t = tv[0:r_conf]
        p_t = p * t + (1.0 - p) * (1.0 - t)
        q = 1.0 - p_t
        ce = -jnp.log(jnp.maximum(p_t, 1e-12))
        alpha_t = FOCAL_ALPHA * t + (1.0 - FOCAL_ALPHA) * (1.0 - t)
        out_ref[0, 0] = jnp.sum(alpha_t * ce * q * q) * scales_ref[0, 0]

        # ---- boxes: L1 + diagonal GIoU (src coords sublanes 0-3, tgt 4-7).
        # Padded lanes hold identical boxes on both sides -> L1 is exactly 0;
        # GIoU pads are masked by the runtime nbox scalar.
        # TODO(synk): if matched counts ever scale past ~1e3, switch GIoU to
        # per-coordinate lane-dense (rows,128) slabs instead of (1,L) rows.
        bx = box_ref[...]
        s = bx[0:4]
        g = bx[4:8]
        out_ref[0, 1] = jnp.sum(jnp.abs(s - g)) * scales_ref[0, 1]

        sx1 = s[0:1] - 0.5 * s[2:3]
        sy1 = s[1:2] - 0.5 * s[3:4]
        sx2 = s[0:1] + 0.5 * s[2:3]
        sy2 = s[1:2] + 0.5 * s[3:4]
        tx1 = g[0:1] - 0.5 * g[2:3]
        ty1 = g[1:2] - 0.5 * g[3:4]
        tx2 = g[0:1] + 0.5 * g[2:3]
        ty2 = g[1:2] + 0.5 * g[3:4]

        area_s = (sx2 - sx1) * (sy2 - sy1)
        area_t = (tx2 - tx1) * (ty2 - ty1)
        iw = jnp.maximum(jnp.minimum(sx2, tx2) - jnp.maximum(sx1, tx1), 0.0)
        ih = jnp.maximum(jnp.minimum(sy2, ty2) - jnp.maximum(sy1, ty1), 0.0)
        inter = iw * ih
        union = area_s + area_t - inter
        iou = inter / (union + 1e-7)
        cw = jnp.maximum(sx2, tx2) - jnp.minimum(sx1, tx1)
        ch = jnp.maximum(sy2, ty2) - jnp.minimum(sy1, ty1)
        area_c = cw * ch
        giou = iou - (area_c - union) / (area_c + 1e-7)
        lane = lax.broadcasted_iota(jnp.int32, giou.shape, 1)
        valid = (lane < nbox_ref[0, 0]).astype(jnp.float32)
        out_ref[0, 2] = jnp.sum((1.0 - giou) * valid) * scales_ref[0, 2]

        # ---- generic L1 (poses/betas/j3ds/j2ds): one fused |src-tgt| over the
        # merged segment block, then 4 static row-slice sums (8-row aligned).
        d = jnp.abs(sv[o_pose:o_dep] - tv[o_pose:o_dep])
        r0 = 0
        out_ref[0, 3] = jnp.sum(d[r0:r0 + r_pose]) * scales_ref[0, 3]
        r0 += r_pose
        out_ref[0, 4] = jnp.sum(d[r0:r0 + r_beta]) * scales_ref[0, 4]
        r0 += r_beta
        out_ref[0, 5] = jnp.sum(d[r0:r0 + r_j3d]) * scales_ref[0, 5]
        r0 += r_j3d
        out_ref[0, 6] = jnp.sum(d[r0:r0 + r_j2d]) * scales_ref[0, 6]

        # ---- depths: |1/(focal*d + eps) - 1/(tgt + eps)|, EUP approx recip.
        inv_s = pl.reciprocal(sv[o_dep:o_dep + r_dep] + 1e-8, approx=True)
        inv_t = pl.reciprocal(tv[o_dep:o_dep + r_dep] + 1e-8, approx=True)
        out_ref[0, 7] = jnp.sum(jnp.abs(inv_s - inv_t)) * scales_ref[0, 7]

    return kernel


# -------------------- jitted gather + pad + kernel call ---------------------

@jax.jit
def _fused_losses(preds, b_idx, s_idx, tgt_arrays, tgt_idx, scales, nbox):
    """Everything from gather to pallas_call lives under this one jit."""
    pred_confs = preds['pred_confs']
    B, Q = pred_confs.shape

    def gather_pred(x):
        return x[b_idx, s_idx]

    def cat_tgt(key):
        # TODO(synk): like the torch reference's valid_idx path, batches
        # missing `key` are skipped; if keys are partially missing src/tgt can
        # misalign (demo targets always carry all keys).
        parts = [d[key][ti] for d, ti in zip(tgt_arrays, tgt_idx) if key in d]
        return jnp.concatenate(parts, axis=0)

    # confs: dense one-hot labels for the matched queries.
    labels = jnp.zeros_like(pred_confs).at[b_idx, s_idx].set(1.0)

    # boxes
    src_bx = gather_pred(preds['pred_boxes']).astype(jnp.float32)
    tgt_bx = cat_tgt('boxes').astype(jnp.float32)
    n = src_bx.shape[0]
    assert n <= MAX_INST, "raise MAX_INST bucket"

    # poses
    src_ps = gather_pred(preds['pred_poses'])
    tgt_ps = cat_tgt('poses')

    # betas: fold column weight (w >= 0 => |a-b|*w == |a*w - b*w|)
    src_be = gather_pred(preds['pred_betas']) * BETAS_WEIGHT
    tgt_be = cat_tgt('betas') * BETAS_WEIGHT

    # j3ds: root-centred, first 54 joints
    src_j3 = gather_pred(preds['pred_j3ds'])
    src_j3 = (src_j3 - src_j3[:, 0:1, :])[:, :54, :]
    tgt_j3 = cat_tgt('j3ds')
    tgt_j3 = (tgt_j3 - tgt_j3[:, 0:1, :])[:, :54, :]

    # j2ds: fold binary mask into both sides; 1/518 folded into the scale
    msk = cat_tgt('j2ds_mask')[:, :54, :]
    src_j2 = gather_pred(preds['pred_j2ds'])[:, :54, :] * msk
    tgt_j2 = cat_tgt('j2ds')[:, :54, :] * msk

    # depths: src = focal * pred_depth[..., 1], tgt = depth[..., 0]
    src_dp = cat_tgt('focals') * gather_pred(preds['pred_depths'])[:, 1:2]
    tgt_dp = cat_tgt('depths')[:, 0:1]

    # --- slab layout: row counts depend only on (B, Q, MAX_INST) -> static ---
    k_pose = int(src_ps.shape[1] * src_ps.shape[2])
    k_beta = int(src_be.shape[1])
    k_j3d = int(src_j3.shape[1] * src_j3.shape[2])
    k_j2d = int(src_j2.shape[1] * src_j2.shape[2])
    r_conf = _rows(B * Q)
    r_pose = _rows(MAX_INST * k_pose)
    r_beta = _rows(MAX_INST * k_beta)
    r_j3d = _rows(MAX_INST * k_j3d)
    r_j2d = _rows(MAX_INST * k_j2d)
    r_dep = _rows(MAX_INST)

    # Pad values are chosen so padded elements contribute exactly 0:
    #   confs: p = t = 1 -> focal 0; L1 segments: 0 both sides -> |0-0| = 0;
    #   depths: 1 both sides -> recip diff 0.
    slab_s = jnp.concatenate([
        _seg(pred_confs, r_conf, 1.0),
        _seg(src_ps, r_pose, 0.0),
        _seg(src_be, r_beta, 0.0),
        _seg(src_j3, r_j3d, 0.0),
        _seg(src_j2, r_j2d, 0.0),
        _seg(src_dp, r_dep, 1.0),
    ], axis=0)
    slab_t = jnp.concatenate([
        _seg(labels, r_conf, 1.0),
        _seg(tgt_ps, r_pose, 0.0),
        _seg(tgt_be, r_beta, 0.0),
        _seg(tgt_j3, r_j3d, 0.0),
        _seg(tgt_j2, r_j2d, 0.0),
        _seg(tgt_dp, r_dep, 1.0),
    ], axis=0)

    # Box slab (8, 128): src cxcywh on sublanes 0-3, tgt on 4-7. Identical pad
    # value on both halves -> padded L1 exactly 0; GIoU pads masked via nbox.
    box_slab = jnp.full((8, _LANES), 0.25, dtype=jnp.float32)
    box_slab = box_slab.at[0:4, :n].set(src_bx.T)
    box_slab = box_slab.at[4:8, :n].set(tgt_bx.T)

    kernel = _build_kernel(r_conf, r_pose, r_beta, r_j3d, r_j2d, r_dep)
    return pl.pallas_call(
        kernel,
        out_shape=jax.ShapeDtypeStruct((1, 8), jnp.float32),
        in_specs=[_SMEM, _SMEM, _VMEM, _VMEM, _VMEM],
        out_specs=_SMEM,
    )(scales, nbox, slab_s, slab_t, box_slab)


# ------------------------------ criterion ------------------------------------

class SetCriterionJax:
    """JAX/Pallas port of SetCriterion.forward (main-output branch)."""

    _OUT_NAMES = ('confs', 'boxes', 'giou', 'poses', 'betas', 'j3ds', 'j2ds',
                  'depths')
    _TGT_KEYS = ('boxes', 'poses', 'betas', 'j3ds', 'j2ds', 'j2ds_mask',
                 'depths', 'focals')

    def __init__(self, losses=('confs', 'boxes', 'poses', 'betas',
                               'j3ds', 'j2ds', 'depths')):
        # TODO(synk): 'kid_offsets' is listed in the torch default but has no
        # entry in loss_map (would KeyError there too); omitted here.
        self.losses = losses

    def _get_src_permutation_idx(self, indices):
        batch_idx = jnp.concatenate(
            [jnp.full(src.shape, i, dtype=jnp.int32)
             for i, (src, _) in enumerate(indices)])
        src_idx = jnp.concatenate([src for src, _ in indices]).astype(jnp.int32)
        return batch_idx, src_idx

    def get_valid_instances(self, targets):
        # TODO(synk): distributed all_reduce / world-size clamp of the torch
        # version is single-host here.
        nvi = {}
        for loss in self.losses:
            n = sum(int(t['pnum']) for t in targets if loss in t)
            nvi[loss] = float(max(n, 1))
        nvi['confs'] = 1.0
        return nvi

    def forward(self, outputs, targets, indices):
        # TODO(synk): Hungarian matcher, dn_meta, aux_outputs and scale_map
        # branches are data-dependent Python control flow; the main-branch
        # losses are reproduced with the matching supplied in `indices`.
        targets = [dict(t) for t in targets]
        for t in targets:
            if not t.get('3d_valid', True):
                for key in ('betas', 'poses', 'j3ds', 'depths', 'focals'):
                    t.pop(key, None)

        num_valid = self.get_valid_instances(targets)
        B, Q = outputs['pred_confs'].shape
        k_pose = int(outputs['pred_poses'].shape[2] * outputs['pred_poses'].shape[3])
        k_beta = int(outputs['pred_betas'].shape[2])
        k_j3d = int(min(54, outputs['pred_j3ds'].shape[2]) * outputs['pred_j3ds'].shape[3])
        k_j2d = int(min(54, outputs['pred_j2ds'].shape[2]) * outputs['pred_j2ds'].shape[3])

        # Runtime scale vector -> SMEM input: changing pnum / matched counts
        # never changes the compiled kernel, only these values.
        def nv(key):
            return num_valid.get(key, 1.0)

        scales = jnp.array([[
            1.0 / (float(B * Q) * nv('confs')),
            1.0 / nv('boxes'),
            1.0 / nv('boxes'),
            1.0 / (float(k_pose) * nv('poses')),
            1.0 / (float(k_beta) * nv('betas')),
            1.0 / (float(k_j3d) * nv('j3ds')),
            1.0 / (float(k_j2d) * J2DS_NORM_SCALE * nv('j2ds')),
            1.0 / nv('depths'),
        ]], dtype=jnp.float32)

        b_idx, s_idx = self._get_src_permutation_idx(indices)
        tgt_idx = tuple(jnp.asarray(t, jnp.int32) for _, t in indices)
        tgt_arrays = tuple({k: t[k] for k in self._TGT_KEYS if k in t}
                           for t in targets)
        preds = {k: outputs[k] for k in
                 ('pred_confs', 'pred_boxes', 'pred_poses', 'pred_betas',
                  'pred_j3ds', 'pred_j2ds', 'pred_depths')}
        nbox = jnp.array([[int(s_idx.shape[0])]], dtype=jnp.int32)

        out = _fused_losses(preds, b_idx, s_idx, tgt_arrays, tgt_idx,
                            scales, nbox)

        losses = {}
        for i, name in enumerate(self._OUT_NAMES):
            if name == 'giou':
                if 'boxes' in self.losses:
                    losses[name] = out[0, i]
            elif name in self.losses:
                losses[name] = out[0, i]
        return losses


# --------------------------------- main --------------------------------------

if __name__ == "__main__":
    key = jax.random.PRNGKey(0)
    B, Q, J = 2, 8, 60                      # batch, queries, joints
    NPOSE, NBETA = 24, 10

    ks = jax.random.split(key, 20)
    outputs = {
        'pred_confs':  jax.nn.sigmoid(jax.random.normal(ks[0], (B, Q))),
        'pred_boxes':  jax.nn.sigmoid(jax.random.normal(ks[1], (B, Q, 4))),
        'pred_poses':  jax.random.normal(ks[2], (B, Q, NPOSE, 6)),
        'pred_betas':  jax.random.normal(ks[3], (B, Q, NBETA)),
        'pred_j3ds':   jax.random.normal(ks[4], (B, Q, J, 3)),
        'pred_j2ds':   jax.random.uniform(ks[5], (B, Q, J, 2)) * 500.0,
        'pred_depths': jnp.abs(jax.random.normal(ks[6], (B, Q, 2))) + 1.0,
    }

    def make_target(n, kbase):
        kk = jax.random.split(kbase, 10)
        return {
            'pnum': n,
            'boxes': jax.nn.sigmoid(jax.random.normal(kk[0], (n, 4))) * 0.5 + 0.1,
            'poses': jax.random.normal(kk[1], (n, NPOSE, 6)),
            'betas': jax.random.normal(kk[2], (n, NBETA)),
            'j3ds': jax.random.normal(kk[3], (n, J, 3)),
            'j2ds': jax.random.uniform(kk[4], (n, J, 2)) * 500.0,
            'j2ds_mask': (jax.random.uniform(kk[5], (n, J, 2)) > 0.3
                          ).astype(jnp.float32),
            'depths': jnp.abs(jax.random.normal(kk[6], (n, 2))) + 2.0,
            'focals': jax.random.uniform(kk[7], (n, 1)) * 1000.0 + 500.0,
            'labels': jnp.zeros((n,), dtype=jnp.int32),
            'detect_all_people': True,
            '3d_valid': True,
        }

    targets = [make_target(3, ks[10]), make_target(2, ks[11])]

    # Fixed deterministic matching (stand-in for the Hungarian matcher):
    indices = [
        (jnp.array([0, 1, 2], dtype=jnp.int32), jnp.array([0, 1, 2], dtype=jnp.int32)),
        (jnp.array([3, 4], dtype=jnp.int32), jnp.array([0, 1], dtype=jnp.int32)),
    ]

    criterion = SetCriterionJax()
    losses = criterion.forward(outputs, targets, indices)
    losses = {k: jax.block_until_ready(v) for k, v in losses.items()}

    ok = all(bool(jnp.isfinite(v)) for v in losses.values())
    if ok:
        print("KERNEL_OK")
    else:
        print("KERNEL_FAILED", {k: float(v) for k, v in losses.items()})
</pallas_src>

<mosaic_0001>
module attributes {stable_mosaic.version = 11 : i64} {
  func.func @kernel(%arg0: memref<1x8xf32, #tpu.memory_space<smem>>, %arg1: memref<1x1xi32, #tpu.memory_space<smem>>, %arg2: memref<64x128xf32, #tpu.memory_space<vmem>>, %arg3: memref<64x128xf32, #tpu.memory_space<vmem>>, %arg4: memref<8x128xf32, #tpu.memory_space<vmem>>, %arg5: memref<1x8xf32, #tpu.memory_space<smem>>) attributes {dimension_semantics = [], scalar_prefetch = 0 : i64, scratch_operands = 0 : i64, tpu.core_type = #tpu.core_type<tc>} {
    %c0 = arith.constant 0 : index
    %c0_0 = arith.constant 0 : index
    %0 = vector.load %arg2[%c0, %c0_0] : memref<64x128xf32, #tpu.memory_space<vmem>>, vector<64x128xf32>
    %c0_1 = arith.constant 0 : index
    %c0_2 = arith.constant 0 : index
    %1 = vector.load %arg3[%c0_1, %c0_2] : memref<64x128xf32, #tpu.memory_space<vmem>>, vector<64x128xf32>
    %2 = vector.extract_strided_slice %0 {offsets = [0, 0], sizes = [8, 128], strides = [1, 1]} : vector<64x128xf32> to vector<8x128xf32>
    %3 = vector.extract_strided_slice %1 {offsets = [0, 0], sizes = [8, 128], strides = [1, 1]} : vector<64x128xf32> to vector<8x128xf32>
    %4 = arith.mulf %2, %3 : vector<8x128xf32>
    %cst = arith.constant 1.000000e+00 : f32
    %5 = vector.broadcast %cst : f32 to vector<8x128xf32>
    %6 = arith.subf %5, %2 : vector<8x128xf32>
    %cst_3 = arith.constant 1.000000e+00 : f32
    %7 = vector.broadcast %cst_3 : f32 to vector<8x128xf32>
    %8 = arith.subf %7, %3 : vector<8x128xf32>
    %9 = arith.mulf %6, %8 : vector<8x128xf32>
    %10 = arith.addf %4, %9 : vector<8x128xf32>
    %cst_4 = arith.constant 1.000000e+00 : f32
    %11 = vector.broadcast %cst_4 : f32 to vector<8x128xf32>
    %12 = arith.subf %11, %10 : vector<8x128xf32>
    %cst_5 = arith.constant 9.99999996E-13 : f32
    %13 = vector.broadcast %cst_5 : f32 to vector<8x128xf32>
    %14 = arith.maximumf %10, %13 : vector<8x128xf32>
    %15 = math.log %14 : vector<8x128xf32>
    %cst_6 = arith.constant 0.000000e+00 : f32
    %16 = vector.broadcast %cst_6 : f32 to vector<8x128xf32>
    %17 = arith.subf %16, %15 : vector<8x128xf32>
    %cst_7 = arith.constant 2.500000e-01 : f32
    %18 = vector.broadcast %cst_7 : f32 to vector<8x128xf32>
    %19 = arith.mulf %18, %3 : vector<8x128xf32>
    %cst_8 = arith.constant 1.000000e+00 : f32
    %20 = vector.broadcast %cst_8 : f32 to vector<8x128xf32>
    %21 = arith.subf %20, %3 : vector<8x128xf32>
    %cst_9 = arith.constant 7.500000e-01 : f32
    %22 = vector.broadcast %cst_9 : f32 to vector<8x128xf32>
    %23 = arith.mulf %22, %21 : vector<8x128xf32>
    %24 = arith.addf %19, %23 : vector<8x128xf32>
    %25 = arith.mulf %24, %17 : vector<8x128xf32>
    %26 = arith.mulf %25, %12 : vector<8x128xf32>
    %27 = arith.mulf %26, %12 : vector<8x128xf32>
    %28 = vector.shape_cast %27 : vector<8x128xf32> to vector<1x8x128xf32>
    %cst_10 = arith.constant dense<0.000000e+00> : vector<1xf32>
    %29 = vector.multi_reduction <add>, %28, %cst_10 [1, 2] : vector<1x8x128xf32> to vector<1xf32>
    %30 = vector.shape_cast %29 : vector<1xf32> to vector<1x1x1xf32>
    %31 = vector.extract %30[0, 0, 0] : f32 from vector<1x1x1xf32>
    %c0_11 = arith.constant 0 : index
    %c0_12 = arith.constant 0 : index
    %32 = memref.load %arg0[%c0_11, %c0_12] : memref<1x8xf32, #tpu.memory_space<smem>>
    %33 = arith.mulf %31, %32 : f32
    %c0_13 = arith.constant 0 : index
    %c0_14 = arith.constant 0 : index
    %34 = memref.load %arg5[%c0_13, %c0_14] : memref<1x8xf32, #tpu.memory_space<smem>>
    memref.store %33, %arg5[%c0_13, %c0_14] : memref<1x8xf32, #tpu.memory_space<smem>>
    %c0_15 = arith.constant 0 : index
    %c0_16 = arith.constant 0 : index
    %35 = vector.load %arg4[%c0_15, %c0_16] : memref<8x128xf32, #tpu.memory_space<vmem>>, vector<8x128xf32>
    %36 = vector.extract_strided_slice %35 {offsets = [0, 0], sizes = [4, 128], strides = [1, 1]} : vector<8x128xf32> to vector<4x128xf32>
    %37 = vector.extract_strided_slice %35 {offsets = [4, 0], sizes = [4, 128], strides = [1, 1]} : vector<8x128xf32> to vector<4x128xf32>
    %38 = arith.subf %36, %37 : vector<4x128xf32>
    %39 = math.absf %38 : vector<4x128xf32>
    %40 = vector.shape_cast %39 : vector<4x128xf32> to vector<1x4x128xf32>
    %cst_17 = arith.constant dense<0.000000e+00> : vector<1xf32>
    %41 = vector.multi_reduction <add>, %40, %cst_17 [1, 2] : vector<1x4x128xf32> to vector<1xf32>
    %42 = vector.shape_cast %41 : vector<1xf32> to vector<1x1x1xf32>
    %43 = vector.extract %42[0, 0, 0] : f32 from vector<1x1x1xf32>
    %c0_18 = arith.constant 0 : index
    %c1 = arith.constant 1 : index
    %44 = memref.load %arg0[%c0_18, %c1] : memref<1x8xf32, #tpu.memory_space<smem>>
    %45 = arith.mulf %43, %44 : f32
    %c0_19 = arith.constant 0 : index
    %c1_20 = arith.constant 1 : index
    %46 = memref.load %arg5[%c0_19, %c1_20] : memref<1x8xf32, #tpu.memory_space<smem>>
    memref.store %45, %arg5[%c0_19, %c1_20] : memref<1x8xf32, #tpu.memory_space<smem>>
    %47 = vector.extract_strided_slice %36 {offsets = [0, 0], sizes = [1, 128], strides = [1, 1]} : vector<4x128xf32> to vector<1x128xf32>
    %48 = vector.extract_strided_slice %36 {offsets = [2, 0], sizes = [1, 128], strides = [1, 1]} : vector<4x128xf32> to vector<1x128xf32>
    %cst_21 = arith.constant 5.000000e-01 : f32
    %49 = vector.broadcast %cst_21 : f32 to vector<1x128xf32>
    %50 = arith.mulf %49, %48 : vector<1x128xf32>
    %51 = arith.subf %47, %50 : vector<1x128xf32>
    %52 = vector.extract_strided_slice %36 {offsets = [1, 0], sizes = [1, 128], strides = [1, 1]} : vector<4x128xf32> to vector<1x128xf32>
    %53 = vector.extract_strided_slice %36 {offsets = [3, 0], sizes = [1, 128], strides = [1, 1]} : vector<4x128xf32> to vector<1x128xf32>
    %cst_22 = arith.constant 5.000000e-01 : f32
    %54 = vector.broadcast %cst_22 : f32 to vector<1x128xf32>
    %55 = arith.mulf %54, %53 : vector<1x128xf32>
    %56 = arith.subf %52, %55 : vector<1x128xf32>
    %57 = vector.extract_strided_slice %36 {offsets = [0, 0], sizes = [1, 128], strides = [1, 1]} : vector<4x128xf32> to vector<1x128xf32>
    %58 = vector.extract_strided_slice %36 {offsets = [2, 0], sizes = [1, 128], strides = [1, 1]} : vector<4x128xf32> to vector<1x128xf32>
    %cst_23 = arith.constant 5.000000e-01 : f32
    %59 = vector.broadcast %cst_23 : f32 to vector<1x128xf32>
    %60 = arith.mulf %59, %58 : vector<1x128xf32>
    %61 = arith.addf %57, %60 : vector<1x128xf32>
    %62 = vector.extract_strided_slice %36 {offsets = [1, 0], sizes = [1, 128], strides = [1, 1]} : vector<4x128xf32> to vector<1x128xf32>
    %63 = vector.extract_strided_slice %36 {offsets = [3, 0], sizes = [1, 128], strides = [1, 1]} : vector<4x128xf32> to vector<1x128xf32>
    %cst_24 = arith.constant 5.000000e-01 : f32
    %64 = vector.broadcast %cst_24 : f32 to vector<1x128xf32>
    %65 = arith.mulf %64, %63 : vector<1x128xf32>
    %66 = arith.addf %62, %65 : vector<1x128xf32>
    %67 = vector.extract_strided_slice %37 {offsets = [0, 0], sizes = [1, 128], strides = [1, 1]} : vector<4x128xf32> to vector<1x128xf32>
    %68 = vector.extract_strided_slice %37 {offsets = [2, 0], sizes = [1, 128], strides = [1, 1]} : vector<4x128xf32> to vector<1x128xf32>
    %cst_25 = arith.constant 5.000000e-01 : f32
    %69 = vector.broadcast %cst_25 : f32 to vector<1x128xf32>
    %70 = arith.mulf %69, %68 : vector<1x128xf32>
    %71 = arith.subf %67, %70 : vector<1x128xf32>
    %72 = vector.extract_strided_slice %37 {offsets = [1, 0], sizes = [1, 128], strides = [1, 1]} : vector<4x128xf32> to vector<1x128xf32>
    %73 = vector.extract_strided_slice %37 {offsets = [3, 0], sizes = [1, 128], strides = [1, 1]} : vector<4x128xf32> to vector<1x128xf32>
    %cst_26 = arith.constant 5.000000e-01 : f32
    %74 = vector.broadcast %cst_26 : f32 to vector<1x128xf32>
    %75 = arith.mulf %74, %73 : vector<1x128xf32>
    %76 = arith.subf %72, %75 : vector<1x128xf32>
    %77 = vector.extract_strided_slice %37 {offsets = [0, 0], sizes = [1, 128], strides = [1, 1]} : vector<4x128xf32> to vector<1x128xf32>
    %78 = vector.extract_strided_slice %37 {offsets = [2, 0], sizes = [1, 128], strides = [1, 1]} : vector<4x128xf32> to vector<1x128xf32>
    %cst_27 = arith.constant 5.000000e-01 : f32
    %79 = vector.broadcast %cst_27 : f32 to vector<1x128xf32>
    %80 = arith.mulf %79, %78 : vector<1x128xf32>
    %81 = arith.addf %77, %80 : vector<1x128xf32>
    %82 = vector.extract_strided_slice %37 {offsets = [1, 0], sizes = [1, 128], strides = [1, 1]} : vector<4x128xf32> to vector<1x128xf32>
    %83 = vector.extract_strided_slice %37 {offsets = [3, 0], sizes = [1, 128], strides = [1, 1]} : vector<4x128xf32> to vector<1x128xf32>
    %cst_28 = arith.constant 5.000000e-01 : f32
    %84 = vector.broadcast %cst_28 : f32 to vector<1x128xf32>
    %85 = arith.mulf %84, %83 : vector<1x128xf32>
    %86 = arith.addf %82, %85 : vector<1x128xf32>
    %87 = arith.subf %61, %51 : vector<1x128xf32>
    %88 = arith.subf %66, %56 : vector<1x128xf32>
    %89 = arith.mulf %87, %88 : vector<1x128xf32>
    %90 = arith.subf %81, %71 : vector<1x128xf32>
    %91 = arith.subf %86, %76 : vector<1x128xf32>
    %92 = arith.mulf %90, %91 : vector<1x128xf32>
    %93 = arith.minimumf %61, %81 : vector<1x128xf32>
    %94 = arith.maximumf %51, %71 : vector<1x128xf32>
    %95 = arith.subf %93, %94 : vector<1x128xf32>
    %cst_29 = arith.constant 0.000000e+00 : f32
    %96 = vector.broadcast %cst_29 : f32 to vector<1x128xf32>
    %97 = arith.maximumf %95, %96 : vector<1x128xf32>
    %98 = arith.minimumf %66, %86 : vector<1x128xf32>
    %99 = arith.maximumf %56, %76 : vector<1x128xf32>
    %100 = arith.subf %98, %99 : vector<1x128xf32>
    %cst_30 = arith.constant 0.000000e+00 : f32
    %101 = vector.broadcast %cst_30 : f32 to vector<1x128xf32>
    %102 = arith.maximumf %100, %101 : vector<1x128xf32>
    %103 = arith.mulf %97, %102 : vector<1x128xf32>
    %104 = arith.addf %89, %92 : vector<1x128xf32>
    %105 = arith.subf %104, %103 : vector<1x128xf32>
    %cst_31 = arith.constant 1.000000e-07 : f32
    %106 = vector.broadcast %cst_31 : f32 to vector<1x128xf32>
    %107 = arith.addf %105, %106 : vector<1x128xf32>
    %108 = arith.divf %103, %107 : vector<1x128xf32>
    %109 = arith.maximumf %61, %81 : vector<1x128xf32>
    %110 = arith.minimumf %51, %71 : vector<1x128xf32>
    %111 = arith.subf %109, %110 : vector<1x128xf32>
    %112 = arith.maximumf %66, %86 : vector<1x128xf32>
    %113 = arith.minimumf %56, %76 : vector<1x128xf32>
    %114 = arith.subf %112, %113 : vector<1x128xf32>
    %115 = arith.mulf %111, %114 : vector<1x128xf32>
    %116 = arith.subf %115, %105 : vector<1x128xf32>
    %cst_32 = arith.constant 1.000000e-07 : f32
    %117 = vector.broadcast %cst_32 : f32 to vector<1x128xf32>
    %118 = arith.addf %115, %117 : vector<1x128xf32>
    %119 = arith.divf %116, %118 : vector<1x128xf32>
    %120 = arith.subf %108, %119 : vector<1x128xf32>
    %121 = tpu.iota {dimensions = array<i32: 1>} : vector<1x128xi32>
    %c0_33 = arith.constant 0 : index
    %c0_34 = arith.constant 0 : index
    %122 = memref.load %arg1[%c0_33, %c0_34] : memref<1x1xi32, #tpu.memory_space<smem>>
    %123 = vector.broadcast %122 : i32 to vector<1x128xi32>
    %124 = arith.cmpi slt, %121, %123 : vector<1x128xi32>
    %125 = arith.extui %124 : vector<1x128xi1> to vector<1x128xi32>
    %126 = arith.sitofp %125 : vector<1x128xi32> to vector<1x128xf32>
    %cst_35 = arith.constant 1.000000e+00 : f32
    %127 = vector.broadcast %cst_35 : f32 to vector<1x128xf32>
    %128 = arith.subf %127, %120 : vector<1x128xf32>
    %129 = arith.mulf %128, %126 : vector<1x128xf32>
    %130 = vector.shape_cast %129 : vector<1x128xf32> to vector<1x1x128xf32>
    %cst_36 = arith.constant dense<0.000000e+00> : vector<1xf32>
    %131 = vector.multi_reduction <add>, %130, %cst_36 [1, 2] : vector<1x1x128xf32> to vector<1xf32>
    %132 = vector.shape_cast %131 : vector<1xf32> to vector<1x1x1xf32>
    %133 = vector.extract %132[0, 0, 0] : f32 from vector<1x1x1xf32>
    %c0_37 = arith.constant 0 : index
    %c2 = arith.constant 2 : index
    %134 = memref.load %arg0[%c0_37, %c2] : memref<1x8xf32, #tpu.memory_space<smem>>
    %135 = arith.mulf %133, %134 : f32
    %c0_38 = arith.constant 0 : index
    %c2_39 = arith.constant 2 : index
    %136 = memref.load %arg5[%c0_38, %c2_39] : memref<1x8xf32, #tpu.memory_space<smem>>
    memref.store %135, %arg5[%c0_38, %c2_39] : memref<1x8xf32, #tpu.memory_space<smem>>
    %137 = vector.extract_strided_slice %0 {offsets = [8, 0], sizes = [48, 128], strides = [1, 1]} : vector<64x128xf32> to vector<48x128xf32>
    %138 = vector.extract_strided_slice %1 {offsets = [8, 0], sizes = [48, 128], strides = [1, 1]} : vector<64x128xf32> to vector<48x128xf32>
    %139 = arith.subf %137, %138 : vector<48x128xf32>
    %140 = math.absf %139 : vector<48x128xf32>
    %141 = vector.extract_strided_slice %140 {offsets = [0, 0], sizes = [16, 128], strides = [1, 1]} : vector<48x128xf32> to vector<16x128xf32>
    %142 = vector.shape_cast %141 : vector<16x128xf32> to vector<1x16x128xf32>
    %cst_40 = arith.constant dense<0.000000e+00> : vector<1xf32>
    %143 = vector.multi_reduction <add>, %142, %cst_40 [1, 2] : vector<1x16x128xf32> to vector<1xf32>
    %144 = vector.shape_cast %143 : vector<1xf32> to vector<1x1x1xf32>
    %145 = vector.extract %144[0, 0, 0] : f32 from vector<1x1x1xf32>
    %c0_41 = arith.constant 0 : index
    %c3 = arith.constant 3 : index
    %146 = memref.load %arg0[%c0_41, %c3] : memref<1x8xf32, #tpu.memory_space<smem>>
    %147 = arith.mulf %145, %146 : f32
    %c0_42 = arith.constant 0 : index
    %c3_43 = arith.constant 3 : index
    %148 = memref.load %arg5[%c0_42, %c3_43] : memref<1x8xf32, #tpu.memory_space<smem>>
    memref.store %147, %arg5[%c0_42, %c3_43] : memref<1x8xf32, #tpu.memory_space<smem>>
    %149 = vector.extract_strided_slice %140 {offsets = [16, 0], sizes = [8, 128], strides = [1, 1]} : vector<48x128xf32> to vector<8x128xf32>
    %150 = vector.shape_cast %149 : vector<8x128xf32> to vector<1x8x128xf32>
    %cst_44 = arith.constant dense<0.000000e+00> : vector<1xf32>
    %151 = vector.multi_reduction <add>, %150, %cst_44 [1, 2] : vector<1x8x128xf32> to vector<1xf32>
    %152 = vector.shape_cast %151 : vector<1xf32> to vector<1x1x1xf32>
    %153 = vector.extract %152[0, 0, 0] : f32 from vector<1x1x1xf32>
    %c0_45 = arith.constant 0 : index
    %c4 = arith.constant 4 : index
    %154 = memref.load %arg0[%c0_45, %c4] : memref<1x8xf32, #tpu.memory_space<smem>>
    %155 = arith.mulf %153, %154 : f32
    %c0_46 = arith.constant 0 : index
    %c4_47 = arith.constant 4 : index
    %156 = memref.load %arg5[%c0_46, %c4_47] : memref<1x8xf32, #tpu.memory_space<smem>>
    memref.store %155, %arg5[%c0_46, %c4_47] : memref<1x8xf32, #tpu.memory_space<smem>>
    %157 = vector.extract_strided_slice %140 {offsets = [24, 0], sizes = [16, 128], strides = [1, 1]} : vector<48x128xf32> to vector<16x128xf32>
    %158 = vector.shape_cast %157 : vector<16x128xf32> to vector<1x16x128xf32>
    %cst_48 = arith.constant dense<0.000000e+00> : vector<1xf32>
    %159 = vector.multi_reduction <add>, %158, %cst_48 [1, 2] : vector<1x16x128xf32> to vector<1xf32>
    %160 = vector.shape_cast %159 : vector<1xf32> to vector<1x1x1xf32>
    %161 = vector.extract %160[0, 0, 0] : f32 from vector<1x1x1xf32>
    %c0_49 = arith.constant 0 : index
    %c5 = arith.constant 5 : index
    %162 = memref.load %arg0[%c0_49, %c5] : memref<1x8xf32, #tpu.memory_space<smem>>
    %163 = arith.mulf %161, %162 : f32
    %c0_50 = arith.constant 0 : index
    %c5_51 = arith.constant 5 : index
    %164 = memref.load %arg5[%c0_50, %c5_51] : memref<1x8xf32, #tpu.memory_space<smem>>
    memref.store %163, %arg5[%c0_50, %c5_51] : memref<1x8xf32, #tpu.memory_space<smem>>
    %165 = vector.extract_strided_slice %140 {offsets = [40, 0], sizes = [8, 128], strides = [1, 1]} : vector<48x128xf32> to vector<8x128xf32>
    %166 = vector.shape_cast %165 : vector<8x128xf32> to vector<1x8x128xf32>
    %cst_52 = arith.constant dense<0.000000e+00> : vector<1xf32>
    %167 = vector.multi_reduction <add>, %166, %cst_52 [1, 2] : vector<1x8x128xf32> to vector<1xf32>
    %168 = vector.shape_cast %167 : vector<1xf32> to vector<1x1x1xf32>
    %169 = vector.extract %168[0, 0, 0] : f32 from vector<1x1x1xf32>
    %c0_53 = arith.constant 0 : index
    %c6 = arith.constant 6 : index
    %170 = memref.load %arg0[%c0_53, %c6] : memref<1x8xf32, #tpu.memory_space<smem>>
    %171 = arith.mulf %169, %170 : f32
    %c0_54 = arith.constant 0 : index
    %c6_55 = arith.constant 6 : index
    %172 = memref.load %arg5[%c0_54, %c6_55] : memref<1x8xf32, #tpu.memory_space<smem>>
    memref.store %171, %arg5[%c0_54, %c6_55] : memref<1x8xf32, #tpu.memory_space<smem>>
    %173 = vector.extract_strided_slice %0 {offsets = [56, 0], sizes = [8, 128], strides = [1, 1]} : vector<64x128xf32> to vector<8x128xf32>
    %cst_56 = arith.constant 9.99999993E-9 : f32
    %174 = vector.broadcast %cst_56 : f32 to vector<8x128xf32>
    %175 = arith.addf %173, %174 : vector<8x128xf32>
    %176 = tpu.reciprocal %175 {approx = true} : vector<8x128xf32> -> vector<8x128xf32>
    %177 = vector.extract_strided_slice %1 {offsets = [56, 0], sizes = [8, 128], strides = [1, 1]} : vector<64x128xf32> to vector<8x128xf32>
    %cst_57 = arith.constant 9.99999993E-9 : f32
    %178 = vector.broadcast %cst_57 : f32 to vector<8x128xf32>
    %179 = arith.addf %177, %178 : vector<8x128xf32>
    %180 = tpu.reciprocal %179 {approx = true} : vector<8x128xf32> -> vector<8x128xf32>
    %181 = arith.subf %176, %180 : vector<8x128xf32>
    %182 = math.absf %181 : vector<8x128xf32>
    %183 = vector.shape_cast %182 : vector<8x128xf32> to vector<1x8x128xf32>
    %cst_58 = arith.constant dense<0.000000e+00> : vector<1xf32>
    %184 = vector.multi_reduction <add>, %183, %cst_58 [1, 2] : vector<1x8x128xf32> to vector<1xf32>
    %185 = vector.shape_cast %184 : vector<1xf32> to vector<1x1x1xf32>
    %186 = vector.extract %185[0, 0, 0] : f32 from vector<1x1x1xf32>
    %c0_59 = arith.constant 0 : index
    %c7 = arith.constant 7 : index
    %187 = memref.load %arg0[%c0_59, %c7] : memref<1x8xf32, #tpu.memory_space<smem>>
    %188 = arith.mulf %186, %187 : f32
    %c0_60 = arith.constant 0 : index
    %c7_61 = arith.constant 7 : index
    %189 = memref.load %arg5[%c0_60, %c7_61] : memref<1x8xf32, #tpu.memory_space<smem>>
    memref.store %188, %arg5[%c0_60, %c7_61] : memref<1x8xf32, #tpu.memory_space<smem>>
    return
  }
}

</mosaic_0001>

<llo_original>
// kernel: _fused_losses.1
$region0: #{_fused_losses.1}
  #allocation0 [shape = 'u32[]', space=smem, size = 0x4, offset = 0x4, fixed_abs, tag = 'smem constant byte address 0x4 - core index']
  #allocation1 [shape = 'u32[72,128]{1,0:T(1,128)}', space=vmem, size = 0x9000, scoped, tag = 'internal scratch']
  #allocation2 [shape = 's32[1,1]{1,0:T(1,128)S(6)}', space=smem, size = 0x200, scoped, tag = 'scoped memory for _fused_losses.1']
  %s0 = inlined_call_operand.vmem [shape: f32[1,8], index: 0, kind: input, shape index: {}]
  %s1 = inlined_call_operand.<no memory space> [shape: s32[1,1], index: 1, kind: input, shape index: {}]
  %s2 = inlined_call_operand.vmem [shape: f32[64,128], index: 2, kind: input, shape index: {}]
  %s3 = inlined_call_operand.vmem [shape: f32[64,128], index: 3, kind: input, shape index: {}]
  %s4 = inlined_call_operand.vmem [shape: f32[8,128], index: 4, kind: input, shape index: {}]
  %s5 = inlined_call_operand.hbm [shape: f32[1,8], index: 5, kind: output, shape index: {}]
  %s6 = sld [smem:[#allocation0]]
  $region34: #{_fused_losses.1} parent=0
    _
  %s8 = ssub.s32 1, %s6
  %s9 = scalar_select 0, %s8, %s6
  %10 = sst [smem:[#allocation2]] %s1
  $region1: #{_fused_losses.1} parent=0
    #allocation3 [shape = 'u8[512]{0}', space=smem, size = 0x200, scoped, tag = 'input window, operand 0, single buffered']
    #allocation4 [shape = 's32[1]{0}', space=sflag, size = 0x4, scoped, tag = 'scoped memory for _fused_losses.1']
    #allocation5 [shape = 's32[1]{0}', space=sflag, size = 0x4, scoped, tag = 'scoped memory for _fused_losses.1']
    #allocation6 [shape = 'u8[512]{0}', space=smem, size = 0x200, scoped, tag = 'output window, operand 0, single buffered']
    %11 = vsyncpa [#allocation5], 0
    %12 = vsyncpa [#allocation4], 0
    // Predicated region
    $region2: #{_fused_losses.1} parent=1 // pred_check
      _
    $region3: #{_fused_losses.1} parent=1 // pred_check_branch
      %14 = sbr.rel (0) target = $region5
    $region4: #{_fused_losses.1} parent=1 // pred_region
      %16 = vsyncadd [#allocation5], 0
      %s18 = sshll.u32 %s0, 4
      %s19 = int_to_ptr.vmem [resolvable:$true] %s18
      %21 = dma.vmem_to_smem %s19, 16, [#allocation3], [#allocation5]
    $region5: #{_fused_losses.1} parent=1 // pred_fallthru
      _
    // Predicated region
    $region6: #{_fused_losses.1} parent=1 // pred_check
      _
    $region7: #{_fused_losses.1} parent=1 // pred_check_branch
      %23 = sbr.rel (0) target = $region9
    $region8: #{_fused_losses.1} parent=1 // pred_region
      _
    $region9: #{_fused_losses.1} parent=1 // pred_fallthru
      _
    // Predicated region
    $region10: #{_fused_losses.1} parent=1 // pred_check
      _
    $region11: #{_fused_losses.1} parent=1 // pred_check_branch
      %25 = sbr.rel (0) target = $region13
    $region12: #{_fused_losses.1} parent=1 // pred_region
      _
    $region13: #{_fused_losses.1} parent=1 // pred_fallthru
      _
    // Predicated region
    $region14: #{_fused_losses.1} parent=1 // pred_check
      _
    $region15: #{_fused_losses.1} parent=1 // pred_check_branch
      %27 = sbr.rel (0) target = $region17
    $region16: #{_fused_losses.1} parent=1 // pred_region
      _
    $region17: #{_fused_losses.1} parent=1 // pred_fallthru
      _
    // Predicated region
    $region18: #{_fused_losses.1} parent=1 // pred_check
      _
    $region19: #{_fused_losses.1} parent=1 // pred_check_branch
      %29 = sbr.rel (0) target = $region21
    $region20: #{_fused_losses.1} parent=1 // pred_region
      _
    $region21: #{_fused_losses.1} parent=1 // pred_fallthru
      _
    // Predicated region
    $region22: #{_fused_losses.1} parent=1 // pred_check
      _
    $region23: #{_fused_losses.1} parent=1 // pred_check_branch
      %31 = sbr.rel (0) target = $region25
    $region24: #{_fused_losses.1} parent=1 // pred_region
      %33 = dma.done [#allocation5], 16
    $region25: #{_fused_losses.1} parent=1 // pred_fallthru
      _
    %34 = sfence
    %v35 = vld [vmem:[%s2] sm:$0xff]
    %v36 = vld [vmem:[%s2 + $0x8] sm:$0xff]
    %v37 = vld [vmem:[%s2 + $0x10] sm:$0xff]
    %v38 = vld [vmem:[%s2 + $0x18] sm:$0xff]
    %v39 = vld [vmem:[%s2 + $0x20] sm:$0xff]
    %v40 = vld [vmem:[%s2 + $0x28] sm:$0xff]
    %v41 = vld [vmem:[%s2 + $0x30] sm:$0xff]
    %v42 = vld [vmem:[%s2 + $0x38] sm:$0xff]
    %v43 = vld [vmem:[%s3] sm:$0xff]
    %v44 = vld [vmem:[%s3 + $0x8] sm:$0xff]
    %v45 = vld [vmem:[%s3 + $0x10] sm:$0xff]
    %v46 = vld [vmem:[%s3 + $0x18] sm:$0xff]
    %v47 = vld [vmem:[%s3 + $0x20] sm:$0xff]
    %v48 = vld [vmem:[%s3 + $0x28] sm:$0xff]
    %v49 = vld [vmem:[%s3 + $0x30] sm:$0xff]
    %v50 = vld [vmem:[%s3 + $0x38] sm:$0xff]
    %v51 = vmul.f32 %v35, %v43
    %v52 = vsub.f32 1.0, %v35
    %v53 = vsub.f32 1.0, %v43
    %v54 = vmul.f32 %v52, %v53
    %v55 = vadd.f32 %v51, %v54
    %v56 = vsub.f32 1.0, %v55
    %v57 = vmax.f32 %v55, 1e-12
    %v58 = vlog2.pop %v57
    %v59 = vmul.f32 %v58, 0.6931472
    %v60 = vsub.f32 0.0, %v59
    %v61 = vmul.f32 %v43, 0.25
    %v62 = vmul.f32 %v53, 0.75
    %v63 = vadd.f32 %v61, %v62
    %v64 = vmul.f32 %v63, %v60
    %v65 = vmul.f32 %v64, %v56
    %v66 = vmul.f32 %v65, %v56
    %67 = vadd.xlane.f32.xlu0 %v66
    %v68 = vpop.xlane.xlu0 %67
    %v69 = vrot.slane %v68, 4
    %v70 = vadd.f32 %v68, %v69
    %v71 = vrot.slane %v70, 2
    %v72 = vadd.f32 %v70, %v71
    %v73 = vrot.slane %v72, 1
    %v74 = vadd.f32 %v72, %v73
    %s75 = vtos %v74
    %s76 = sld [smem:[#allocation3]]
    %s77 = smul.f32 %s75, %s76
    %s78 = scalar_lea.smem [#allocation6], 0
    %79 = sst [smem:[%s78]] %s77
    %v80 = vld [vmem:[%s4] sm:$0xff]
    %v82 = vrot.slane %v80, 4
    %v84 = vsub.f32 %v80, %v82
    %v85 = vand.u32 2147483647, %v84
    %vm86 = vcmask 1043456
    %v87 = vsel %vm86, %v85, 0.0
    %88 = vadd.xlane.f32.xlu0 %v87
    %v89 = vpop.xlane.xlu0 %88
    %v90 = vrot.slane %v89, 4
    %v91 = vadd.f32 %v89, %v90
    %v92 = vrot.slane %v91, 2
    %v93 = vadd.f32 %v91, %v92
    %v94 = vrot.slane %v93, 1
    %v95 = vadd.f32 %v93, %v94
    %s96 = vtos %v95
    %s97 = sld [smem:[#allocation3 + $0x1]]
    %s98 = smul.f32 %s96, %s97
    %s99 = scalar_lea.smem [#allocation6], 1
    %100 = sst [smem:[%s99]] %s98
    %v101 = vmul.f32 %v80, 0.5
    %v103 = vrot.slane %v101, 2
    %v105 = vsub.f32 %v80, %v103
    %v106 = vadd.f32 %v80, %v103
    %v107 = vsub.f32 %v106, %v105
    %v109 = vrot.slane %v107, 1
    %v111 = vmul.f32 %v107, %v109
    %v113 = vrot.slane %v106, 4
    %v115 = vmin.f32 %v106, %v113
    %v117 = vrot.slane %v105, 4
    %v119 = vmax.f32 %v105, %v117
    %v120 = vsub.f32 %v115, %v119
    %v121 = vmax.f32 %v120, 0.0
    %v123 = vrot.slane %v121, 1
    %v125 = vmul.f32 %v121, %v123
    %v127 = vrot.slane %v111, 4
    %v129 = vadd.f32 %v111, %v127
    %v130 = vsub.f32 %v129, %v125
    %v131 = vadd.f32 %v130, 1e-07
    %v132 = vrcp.pop %v131
    %v133 = vmul.f32 %v131, %v132
    %v134 = vsub.f32 1.0, %v133
    %v135 = vmul.f32 %v132, %v134
    %v136 = vadd.f32 %v132, %v135
    %vm137 = vweird.f32 %v131
    %vm138 = vweird.f32 %v132
    %vm139 = vmor %vm137, %vm138
    %v140 = vsel %vm139, %v132, %v136
    %v141 = vand.u32 2147483647, %v131
    %vm142 = vcmp.eq.f32.partialorder %v141, 8.507059e+37
    %v143 = vand.u32 %v131, 2147483648
    %v144 = vor.u32 1.1754944e-38, %v143
    %v145 = vsel %vm142, %v144, %v140
    %v146 = vmul.f32 %v125, %v145
    %v147 = vmax.f32 %v106, %v113
    %v148 = vmin.f32 %v105, %v117
    %v149 = vsub.f32 %v147, %v148
    %v151 = vrot.slane %v149, 1
    %v153 = vmul.f32 %v149, %v151
    %v154 = vsub.f32 %v153, %v130
    %v155 = vadd.f32 %v153, 1e-07
    %v156 = vrcp.pop %v155
    %v157 = vmul.f32 %v155, %v156
    %v158 = vsub.f32 1.0, %v157
    %v159 = vmul.f32 %v156, %v158
    %v160 = vadd.f32 %v156, %v159
    %vm161 = vweird.f32 %v155
    %vm162 = vweird.f32 %v156
    %vm163 = vmor %vm161, %vm162
    %v164 = vsel %vm163, %v156, %v160
    %v165 = vand.u32 2147483647, %v155
    %vm166 = vcmp.eq.f32.partialorder %v165, 8.507059e+37
    %v167 = vand.u32 %v155, 2147483648
    %v168 = vor.u32 1.1754944e-38, %v167
    %v169 = vsel %vm166, %v168, %v164
    %v170 = vmul.f32 %v154, %v169
    %v171 = vsub.f32 %v146, %v170
    %v172 = vlaneseq
    %v173 = vand.u32 %v172, 127
    %s174 = sld [smem:[#allocation2]]
    %v175 = vstv %s174
    %vm176 = vcmp.lt.s32.totalorder %v173, %v175
    %v177 = vsel %vm176, 1, 0
    %v178 = vcvt.s32.f32 %v177
    %v179 = vsub.f32 1.0, %v171
    %v180 = vmul.f32 %v179, %v178
    %vm181 = vcmask 1040384
    %v182 = vsel %vm181, %v180, 0.0
    %183 = vadd.xlane.f32.xlu0 %v182
    %v184 = vpop.xlane.xlu0 %183
    %v185 = vrot.slane %v184, 4
    %v186 = vadd.f32 %v184, %v185
    %v187 = vrot.slane %v186, 2
    %v188 = vadd.f32 %v186, %v187
    %v189 = vrot.slane %v188, 1
    %v190 = vadd.f32 %v188, %v189
    %s191 = vtos %v190
    %s192 = sld [smem:[#allocation3 + $0x2]]
    %s193 = smul.f32 %s191, %s192
    %s194 = scalar_lea.smem [#allocation6], 2
    %195 = sst [smem:[%s194]] %s193
    %v196 = vsub.f32 %v36, %v44
    %v197 = vsub.f32 %v37, %v45
    %v198 = vsub.f32 %v38, %v46
    %v199 = vsub.f32 %v39, %v47
    %v200 = vsub.f32 %v40, %v48
    %v201 = vsub.f32 %v41, %v49
    %v202 = vand.u32 2147483647, %v196
    %v203 = vand.u32 2147483647, %v197
    %v204 = vand.u32 2147483647, %v198
    %v205 = vand.u32 2147483647, %v199
    %v206 = vand.u32 2147483647, %v200
    %v207 = vand.u32 2147483647, %v201
    %v208 = vadd.f32 %v202, %v203
    %209 = vadd.xlane.f32.xlu0 %v208
    %v210 = vpop.xlane.xlu0 %209
    %v211 = vrot.slane %v210, 4
    %v212 = vadd.f32 %v210, %v211
    %v213 = vrot.slane %v212, 2
    %v214 = vadd.f32 %v212, %v213
    %v215 = vrot.slane %v214, 1
    %v216 = vadd.f32 %v214, %v215
    %s217 = vtos %v216
    %s218 = sld [smem:[#allocation3 + $0x3]]
    %s219 = smul.f32 %s217, %s218
    %s220 = scalar_lea.smem [#allocation6], 3
    %221 = sst [smem:[%s220]] %s219
    %222 = vadd.xlane.f32.xlu0 %v204
    %v223 = vpop.xlane.xlu0 %222
    %v224 = vrot.slane %v223, 4
    %v225 = vadd.f32 %v223, %v224
    %v226 = vrot.slane %v225, 2
    %v227 = vadd.f32 %v225, %v226
    %v228 = vrot.slane %v227, 1
    %v229 = vadd.f32 %v227, %v228
    %s230 = vtos %v229
    %s231 = sld [smem:[#allocation3 + $0x4]]
    %s232 = smul.f32 %s230, %s231
    %s233 = scalar_lea.smem [#allocation6], 4
    %234 = sst [smem:[%s233]] %s232
    %v235 = vadd.f32 %v205, %v206
    %236 = vadd.xlane.f32.xlu0 %v235
    %v237 = vpop.xlane.xlu0 %236
    %v238 = vrot.slane %v237, 4
    %v239 = vadd.f32 %v237, %v238
    %v240 = vrot.slane %v239, 2
    %v241 = vadd.f32 %v239, %v240
    %v242 = vrot.slane %v241, 1
    %v243 = vadd.f32 %v241, %v242
    %s244 = vtos %v243
    %s245 = sld [smem:[#allocation3 + $0x5]]
    %s246 = smul.f32 %s244, %s245
    %s247 = scalar_lea.smem [#allocation6], 5
    %248 = sst [smem:[%s247]] %s246
    %249 = vadd.xlane.f32.xlu0 %v207
    %v250 = vpop.xlane.xlu0 %249
    %v251 = vrot.slane %v250, 4
    %v252 = vadd.f32 %v250, %v251
    %v253 = vrot.slane %v252, 2
    %v254 = vadd.f32 %v252, %v253
    %v255 = vrot.slane %v254, 1
    %v256 = vadd.f32 %v254, %v255
    %s257 = vtos %v256
    %s258 = sld [smem:[#allocation3 + $0x6]]
    %s259 = smul.f32 %s257, %s258
    %s260 = scalar_lea.smem [#allocation6], 6
    %261 = sst [smem:[%s260]] %s259
    %v262 = vadd.f32 %v42, 1e-08
    %v263 = vrcp.pop %v262
    %v264 = vadd.f32 %v50, 1e-08
    %v265 = vrcp.pop %v264
    %v266 = vsub.f32 %v263, %v265
    %v267 = vand.u32 2147483647, %v266
    %268 = vadd.xlane.f32.xlu0 %v267
    %v269 = vpop.xlane.xlu0 %268
    %v270 = vrot.slane %v269, 4
    %v271 = vadd.f32 %v269, %v270
    %v272 = vrot.slane %v271, 2
    %v273 = vadd.f32 %v271, %v272
    %v274 = vrot.slane %v273, 1
    %v275 = vadd.f32 %v273, %v274
    %s276 = vtos %v275
    %s277 = sld [smem:[#allocation3 + $0x7]]
    %s278 = smul.f32 %s276, %s277
    %s279 = scalar_lea.smem [#allocation6], 7
    %280 = sst [smem:[%s279]] %s278
    // Predicated region
    $region26: #{_fused_losses.1} parent=1 // pred_check
      _
    $region27: #{_fused_losses.1} parent=1 // pred_check_branch
      %282 = sbr.rel (0) target = $region29
    $region28: #{_fused_losses.1} parent=1 // pred_region
      %284 = vsyncadd [#allocation4], 0
      %s286 = sshll.u32 %s5, 4
      %s287 = int_to_ptr.hbm [resolvable:$true] %s286
      %289 = dma.smem_to_hbm [#allocation6], 16, %s287, [#allocation4]
    $region29: #{_fused_losses.1} parent=1 // pred_fallthru
      _
    // Predicated region
    $region30: #{_fused_losses.1} parent=1 // pred_check
      _
    $region31: #{_fused_losses.1} parent=1 // pred_check_branch
      %291 = sbr.rel (0) target = $region33
    $region32: #{_fused_losses.1} parent=1 // pred_region
      %293 = dma.done [#allocation4], 16
    $region33: #{_fused_losses.1} parent=1 // pred_fallthru
      _
    %294 = sfence
    %295 = vsyncpa [#allocation4], 1
    %296 = vsyncpa [#allocation5], 1

</llo_original>
